<compile_context>
chip_gen: v5e
topology: v5e:2x2
jax: 0.10.0
libtpu: 0.0.40
codegen_flags: <defaults>
</compile_context>

<pallas_src>
import functools
import math

import jax
import jax.numpy as jnp
from jax.experimental import pallas as pl
from jax.experimental.pallas import tpu as pltpu


# -----------------------------------------------------------------------------
# Small helpers
# -----------------------------------------------------------------------------
def _layer_norm(z, g, b, eps=1e-5):
    mu = jnp.mean(z, axis=-1, keepdims=True)
    var = jnp.mean(jnp.square(z - mu), axis=-1, keepdims=True)
    return (z - mu) * jax.lax.rsqrt(var + eps) * g + b


def _pick_tile(L, cap):
    """Largest multiple-of-8 divisor of L that is <= cap (else L itself)."""
    if L <= cap:
        return L
    start = cap - (cap % 8)
    for t in range(start, 7, -8):
        if L % t == 0:
            return t
    return L


def _pick_q_tile(L, N, cap):
    t = _pick_tile(L, cap)
    if N == 1 and t == L:
        # v7x has 2 TensorCores: with batch==1 make sure there are >= 2 parallel
        # query tiles so both cores get work (harmless on single-TC v5e/v6e).
        half_cap = max(8, (L // 2) - ((L // 2) % 8))
        t2 = _pick_tile(L, half_cap)
        if 8 <= t2 < L:
            t = t2
    return t


def _vmem_cap_bytes():
    try:
        info = pltpu.get_tpu_info()
        cap = getattr(info, "vmem_capacity_bytes", None)
        if cap:
            return int(cap)
    except Exception:
        pass
    return 64 << 20          # conservative (v7x) default


def _vmem_limit(est_bytes):
    cap = _vmem_cap_bytes()
    ceiling = int(cap * 0.8)                 # ~51 MiB on v7x, ~102 MiB on v5e/v6e
    return int(max(16 << 20, min(ceiling, max(32 << 20, est_bytes))))


# -----------------------------------------------------------------------------
# Projection kernels (run once per block, hoisted out of the query-tile loop)
# -----------------------------------------------------------------------------
def _qkv_proj_kernel(scale, x_ref, ln_g, ln_b, w_ref, b_ref, kv_out, q_out):
    """Self block: kv || q = norm1(x) @ [wk|wv|wq] + b ; q pre-scaled by 1/sqrt(dh)."""
    xn = _layer_norm(x_ref[0].astype(jnp.float32), ln_g[...], ln_b[...])
    proj = jnp.dot(xn.astype(jnp.bfloat16), w_ref[...],
                   preferred_element_type=jnp.float32) + b_ref[...]
    C = q_out.shape[-1]
    kv_out[0] = proj[:, :2 * C].astype(kv_out.dtype)
    q_out[0] = (proj[:, 2 * C:] * scale).astype(q_out.dtype)


def _proj_kernel(apply_norm, scale, x_ref, *refs):
    """Generic (optionally normed / scaled) linear projection of one sequence tile."""
    if apply_norm:
        ln_g, ln_b, w_ref, b_ref, out_ref = refs
        src = _layer_norm(x_ref[0].astype(jnp.float32), ln_g[...], ln_b[...])
    else:
        w_ref, b_ref, out_ref = refs
        src = x_ref[0]
    proj = jnp.dot(src.astype(jnp.bfloat16), w_ref[...],
                   preferred_element_type=jnp.float32) + b_ref[...]
    if scale != 1.0:
        proj = proj * scale
    out_ref[0] = proj.astype(out_ref.dtype)


def _proj_common(grid, in_specs, out_shape, out_specs, kernel, args):
    return pl.pallas_call(
        kernel,
        out_shape=out_shape,
        grid=grid,
        in_specs=in_specs,
        out_specs=out_specs,
        compiler_params=pltpu.CompilerParams(
            dimension_semantics=("parallel", "parallel")),
    )(*args)


def _qkv_project_self(x, params, nhead, tile_cap=512):
    N, L, C = x.shape
    scale = 1.0 / math.sqrt(C // nhead)
    tc = _pick_tile(L, tile_cap)
    wkvq = jnp.concatenate([params['wkv'], params['wq']], axis=1)    # (C, 3C) [K|V|Q] bf16
    bkvq = jnp.concatenate([params['bkv'], params['bq']], axis=1)    # (1, 3C) f32
    kv, q = _proj_common(
        grid=(N, L // tc),
        in_specs=[pl.BlockSpec((1, tc, C), lambda n, c: (n, c, 0)),
                  pl.BlockSpec((1, C), lambda n, c: (0, 0)),
                  pl.BlockSpec((1, C), lambda n, c: (0, 0)),
                  pl.BlockSpec((C, 3 * C), lambda n, c: (0, 0)),
                  pl.BlockSpec((1, 3 * C), lambda n, c: (0, 0))],
        out_shape=(jax.ShapeDtypeStruct((N, L, 2 * C), jnp.bfloat16),
                   jax.ShapeDtypeStruct((N, L, C), jnp.bfloat16)),
        out_specs=(pl.BlockSpec((1, tc, 2 * C), lambda n, c: (n, c, 0)),
                   pl.BlockSpec((1, tc, C), lambda n, c: (n, c, 0))),
        kernel=functools.partial(_qkv_proj_kernel, scale),
        args=(x, params['ln1_g'], params['ln1_b'], wkvq, bkvq))
    return q, kv


def _q_project_cross(x, params, nhead, tile_cap=512):
    N, L, C = x.shape
    scale = 1.0 / math.sqrt(C // nhead)
    tc = _pick_tile(L, tile_cap)
    return _proj_common(
        grid=(N, L // tc),
        in_specs=[pl.BlockSpec((1, tc, C), lambda n, c: (n, c, 0)),
                  pl.BlockSpec((1, C), lambda n, c: (0, 0)),
                  pl.BlockSpec((1, C), lambda n, c: (0, 0)),
                  pl.BlockSpec((C, C), lambda n, c: (0, 0)),
                  pl.BlockSpec((1, C), lambda n, c: (0, 0))],
        out_shape=jax.ShapeDtypeStruct((N, L, C), jnp.bfloat16),
        out_specs=pl.BlockSpec((1, tc, C), lambda n, c: (n, c, 0)),
        kernel=functools.partial(_proj_kernel, True, scale),
        args=(x, params['ln1_g'], params['ln1_b'], params['wq'], params['bq']))


def _kv_project_cross(kv_feat, params, tile_cap=512):
    N, Lk, C = kv_feat.shape
    tc = _pick_tile(Lk, tile_cap)
    return _proj_common(
        grid=(N, Lk // tc),
        in_specs=[pl.BlockSpec((1, tc, C), lambda n, c: (n, c, 0)),
                  pl.BlockSpec((C, 2 * C), lambda n, c: (0, 0)),
                  pl.BlockSpec((1, 2 * C), lambda n, c: (0, 0))],
        out_shape=jax.ShapeDtypeStruct((N, Lk, 2 * C), jnp.bfloat16),
        out_specs=pl.BlockSpec((1, tc, 2 * C), lambda n, c: (n, c, 0)),
        kernel=functools.partial(_proj_kernel, False, 1.0),
        args=(kv_feat, params['wkv'], params['bkv']))


# -----------------------------------------------------------------------------
# Main kernel: flash-style attention + out-proj + MLP (one CrossBlock body)
# grid = (batch, query_tile, kv_tile); kv_tile is the "arbitrary" reduction axis.
# -----------------------------------------------------------------------------
def _attn_block_kernel(nhead, x_ref, q_ref, kv_ref,
                       wo, bo, ln2_g, ln2_b, w1, b1, w2, b2,
                       out_ref, m_ref, l_ref, acc_ref):
    C = x_ref.shape[-1]
    dh = C // nhead
    ki = pl.program_id(2)

    @pl.when(ki == 0)
    def _():
        m_ref[...] = jnp.full(m_ref.shape, -jnp.inf, jnp.float32)
        l_ref[...] = jnp.zeros(l_ref.shape, jnp.float32)
        acc_ref[...] = jnp.zeros(acc_ref.shape, jnp.float32)

    q = q_ref[0]            # (tq, C)  bf16, already scaled by 1/sqrt(dh)
    kv = kv_ref[0]          # (tk, 2C) bf16  ([K | V])

    # Online-softmax update, statically unrolled over heads (dh = C//nhead is an
    # intrinsic property of the model; it under-fills the MXU contraction).
    for h in range(nhead):
        sl = slice(h * dh, (h + 1) * dh)
        s = jax.lax.dot_general(q[:, sl], kv[:, sl], (((1,), (1,)), ((), ())),
                                preferred_element_type=jnp.float32)     # (tq, tk)
        m_prev = m_ref[:, h:h + 1]
        m_new = jnp.maximum(m_prev, jnp.max(s, axis=-1, keepdims=True))
        alpha = jnp.exp(m_prev - m_new)
        p = jnp.exp(s - m_new)
        l_ref[:, h:h + 1] = alpha * l_ref[:, h:h + 1] + jnp.sum(p, axis=-1, keepdims=True)
        acc_ref[:, sl] = alpha * acc_ref[:, sl] + jnp.dot(
            p.astype(jnp.bfloat16), kv[:, C + h * dh:C + (h + 1) * dh],
            preferred_element_type=jnp.float32)
        m_ref[:, h:h + 1] = m_new

    @pl.when(ki == pl.num_programs(2) - 1)
    def _():
        x_tile = x_ref[0].astype(jnp.float32)
        # Per-head out-projection accumulated in registers (no scratch round trip).
        attn = jnp.zeros((x_tile.shape[0], C), jnp.float32)
        wo_all = wo[...]
        for h in range(nhead):
            sl = slice(h * dh, (h + 1) * dh)
            inv_l = pl.reciprocal(l_ref[:, h:h + 1], approx=True)
            ctx = (acc_ref[:, sl] * inv_l).astype(jnp.bfloat16)
            attn = attn + jnp.dot(ctx, wo_all[sl, :], preferred_element_type=jnp.float32)
        attn = attn + bo[...]
        x1 = x_tile + attn                                   # residual 1 (f32)

        xn2 = _layer_norm(x1, ln2_g[...], ln2_b[...])
        h_mid = jnp.dot(xn2.astype(jnp.bfloat16), w1[...],
                        preferred_element_type=jnp.float32) + b1[...]
        h_mid = jax.nn.gelu(h_mid, approximate=False)        # erf-GELU (matches reference)
        y = jnp.dot(h_mid.astype(jnp.bfloat16), w2[...],
                    preferred_element_type=jnp.float32) + b2[...]
        out_ref[0] = (x1 + y).astype(out_ref.dtype)          # residual 2, bf16 store


def _attn_vmem_limit(tq, tk, C, hidden, nhead, weights):
    f32, bf16 = 4, 2
    tiles = 2 * (2 * tq * C * bf16 + tk * 2 * C * bf16 + tq * C * bf16)   # x,q,kv,out (double-buffered)
    w_bytes = 2 * sum(int(w.size) * int(w.dtype.itemsize) for w in weights)
    scratch = tq * (2 * nhead + C) * f32
    live = (tq * tk * (f32 + bf16)            # one head's scores / probs
            + tq * hidden * (f32 + bf16)      # MLP hidden
            + 8 * tq * C * f32)               # epilogue temporaries
    return _vmem_limit(int(1.5 * (tiles + w_bytes + scratch + live)))


def _attn_cost(N, L, Lk, C, hidden, nhead, weights):
    flops = 2 * N * (2 * L * Lk * C + L * C * C + 2 * L * C * hidden)
    transcendentals = N * (nhead * L * Lk + L * hidden)
    w_bytes = sum(int(w.size) * int(w.dtype.itemsize) for w in weights)
    bytes_accessed = N * (2 * L * C * 3 + 2 * Lk * 2 * C) + w_bytes   # bf16 x,q,out + kv
    return pl.CostEstimate(flops=int(flops), transcendentals=int(transcendentals),
                           bytes_accessed=int(bytes_accessed))


def cross_block(x, params, nhead, kv=None, attn_bias=None, is_self=True,
                q_tile_cap=512, k_tile_cap=512):
    """One CrossBlock over tokens-last features x: [N, L, C]. Returns bf16 [N, L, C]."""
    # TODO(synk): additive attention bias from the reference is not implemented.
    assert attn_bias is None
    N, L, C = x.shape
    assert C % nhead == 0
    hidden = params['w1'].shape[1]
    x = x.astype(jnp.bfloat16)

    if is_self:
        assert kv is None, "self block takes k/v from norm1(x); do not pass kv"
        q_proj, kv_proj = _qkv_project_self(x, params, nhead)
        Lk = L
    else:
        assert kv is not None
        kv = kv.astype(jnp.bfloat16)
        Lk = kv.shape[1]
        q_proj = _q_project_cross(x, params, nhead)
        kv_proj = _kv_project_cross(kv, params)

    tq = _pick_q_tile(L, N, q_tile_cap)
    tk = _pick_tile(Lk, k_tile_cap)
    n_q, n_k = L // tq, Lk // tk

    weights = [params[k] for k in ('wo', 'bo', 'ln2_g', 'ln2_b', 'w1', 'b1', 'w2', 'b2')]

    in_specs = [pl.BlockSpec((1, tq, C), lambda n, qi, ki: (n, qi, 0)),        # x (residual)
                pl.BlockSpec((1, tq, C), lambda n, qi, ki: (n, qi, 0)),        # q (pre-scaled)
                pl.BlockSpec((1, tk, 2 * C), lambda n, qi, ki: (n, ki, 0))]    # kv chunk
    in_specs += [pl.BlockSpec(w.shape, lambda n, qi, ki: (0, 0)) for w in weights]

    kernel = functools.partial(_attn_block_kernel, nhead)

    return pl.pallas_call(
        kernel,
        out_shape=jax.ShapeDtypeStruct((N, L, C), jnp.bfloat16),
        grid=(N, n_q, n_k),
        in_specs=in_specs,
        out_specs=pl.BlockSpec((1, tq, C), lambda n, qi, ki: (n, qi, 0)),
        scratch_shapes=[pltpu.VMEM((tq, nhead), jnp.float32),     # running max  (per head)
                        pltpu.VMEM((tq, nhead), jnp.float32),     # running sum  (per head)
                        pltpu.VMEM((tq, C), jnp.float32)],        # unnormalized context
        compiler_params=pltpu.CompilerParams(
            dimension_semantics=("parallel", "parallel", "arbitrary"),
            vmem_limit_bytes=_attn_vmem_limit(tq, tk, C, hidden, nhead, weights)),
        cost_estimate=_attn_cost(N, L, Lk, C, hidden, nhead, weights),
    )(x, q_proj, kv_proj, *weights)


# -----------------------------------------------------------------------------
# Plain-JAX glue: positional encoding table, rearranges, parameter init
# -----------------------------------------------------------------------------
def _pe_tokens(C, H, W, max_shape=(256, 256)):
    """PositionEncodingSineNorm as a (H*W, C) tokens-last table."""
    y_pos = jnp.broadcast_to(jnp.arange(1, H + 1, dtype=jnp.float32)[:, None], (H, W)) * (max_shape[0] / H)
    x_pos = jnp.broadcast_to(jnp.arange(1, W + 1, dtype=jnp.float32)[None, :], (H, W)) * (max_shape[1] / W)
    div = jnp.exp(jnp.arange(0, C // 2, 2, dtype=jnp.float32) * (-math.log(10000.0) / (C // 2)))
    div = div[:, None, None]
    pe = jnp.zeros((C, H, W), jnp.float32)
    pe = pe.at[0::4].set(jnp.sin(x_pos[None] * div))
    pe = pe.at[1::4].set(jnp.cos(x_pos[None] * div))
    pe = pe.at[2::4].set(jnp.sin(y_pos[None] * div))
    pe = pe.at[3::4].set(jnp.cos(y_pos[None] * div))
    return pe.reshape(C, H * W).T                              # (H*W, C)


def _nchw_to_nlc(x):
    N, C, H, W = x.shape
    return jnp.transpose(x, (0, 2, 3, 1)).reshape(N, H * W, C)


def _nlc_to_nchw(x, H, W):
    N, L, C = x.shape
    return jnp.transpose(x.reshape(N, H, W, C), (0, 3, 1, 2))


def _xavier_uniform(key, shape):
    bound = math.sqrt(6.0 / (shape[0] + shape[1]))
    return jax.random.uniform(key, shape, jnp.float32, -bound, bound)


def init_block_params(key, d_model, nhead, mlp_ratio=4):
    hidden = d_model * mlp_ratio
    ks = jax.random.split(key, 6)
    wk = _xavier_uniform(ks[1], (d_model, d_model))
    wv = _xavier_uniform(ks[2], (d_model, d_model))
    bf16 = jnp.bfloat16
    return {
        'ln1_g': jnp.ones((1, d_model), jnp.float32),
        'ln1_b': jnp.zeros((1, d_model), jnp.float32),
        'wq': _xavier_uniform(ks[0], (d_model, d_model)).astype(bf16),
        'bq': jnp.zeros((1, d_model), jnp.float32),
        'wkv': jnp.concatenate([wk, wv], axis=1).astype(bf16),       # fused (C, 2C) [K|V]
        'bkv': jnp.zeros((1, 2 * d_model), jnp.float32),
        'wo': _xavier_uniform(ks[3], (d_model, d_model)).astype(bf16),
        'bo': jnp.zeros((1, d_model), jnp.float32),
        'ln2_g': jnp.ones((1, d_model), jnp.float32),
        'ln2_b': jnp.zeros((1, d_model), jnp.float32),
        'w1': _xavier_uniform(ks[4], (d_model, hidden)).astype(bf16),
        'b1': jnp.zeros((1, hidden), jnp.float32),
        'w2': _xavier_uniform(ks[5], (hidden, d_model)).astype(bf16),
        'b2': jnp.zeros((1, d_model), jnp.float32),
    }


# -----------------------------------------------------------------------------
# FMT module (forward semantics of the PyTorch reference)
# -----------------------------------------------------------------------------
class FMT:
    def __init__(self, key, d_model=64, nhead=4, layer_names=('self', 'cross'), mlp_ratio=4):
        self.d_model = d_model
        self.nhead = nhead
        self.layer_names = list(layer_names)
        keys = jax.random.split(key, len(self.layer_names))
        self.layer_params = [init_block_params(k, d_model, nhead, mlp_ratio) for k in keys]

    def __call__(self, ref_feature=None, src_feature=None, feat='ref', attn_bias=None):
        assert ref_feature is not None
        if feat == 'ref':
            N, C, H, W = ref_feature.shape
            assert C == self.d_model
            x = _nchw_to_nlc(ref_feature) + _pe_tokens(C, H, W)[None]
            outs = []
            for params, name in zip(self.layer_params, self.layer_names):
                if name == 'self':
                    x = cross_block(x, params, self.nhead, is_self=True, attn_bias=attn_bias)
                    outs.append(_nlc_to_nchw(x, H, W))
            return outs
        elif feat == 'src':
            assert self.d_model == ref_feature[0].shape[1]
            N, C, H, W = ref_feature[0].shape
            _, _, Hs, Ws = src_feature.shape
            refs = [_nchw_to_nlc(r) for r in ref_feature]
            src = _nchw_to_nlc(src_feature) + _pe_tokens(self.d_model, Hs, Ws)[None]
            for i, (params, name) in enumerate(zip(self.layer_params, self.layer_names)):
                if name == 'self':
                    src = cross_block(src, params, self.nhead, is_self=True, attn_bias=attn_bias)
                elif name == 'cross':
                    ref_idx = i if len(refs) == len(self.layer_params) else i // 2
                    src = cross_block(src, params, self.nhead, kv=refs[ref_idx],
                                      is_self=False, attn_bias=attn_bias)
                else:
                    raise KeyError
            return _nlc_to_nchw(src, H, W)
        else:
            raise ValueError('Wrong feature name')


if __name__ == "__main__":
    key = jax.random.PRNGKey(0)
    k_params, k_ref, k_src = jax.random.split(key, 3)

    d_model, nhead, N, H, W = 64, 4, 2, 8, 8          # seq = H*W = 64
    fmt = FMT(k_params, d_model=d_model, nhead=nhead)

    ref = jax.random.normal(k_ref, (N, d_model, H, W), jnp.float32)
    src = jax.random.normal(k_src, (N, d_model, H, W), jnp.float32)

    # 'ref' path: self-attention over the reference feature map
    ref_list = fmt(ref_feature=ref, feat='ref')
    jax.block_until_ready(ref_list)

    # 'src' path: self-attention on src, then cross-attention against ref
    out = fmt(ref_feature=ref_list, src_feature=src, feat='src')
    jax.block_until_ready(out)

    assert out.shape == (N, d_model, H, W)
    assert bool(jnp.isfinite(out.astype(jnp.float32)).all())
    print("KERNEL_OK")
</pallas_src>

<mosaic_0001>
module attributes {stable_mosaic.version = 11 : i64} {
  func.func @_qkv_proj_kernel(%arg0: i32, %arg1: i32, %arg2: memref<1x64x64xbf16, #tpu.memory_space<vmem>>, %arg3: memref<1x64xf32, #tpu.memory_space<vmem>>, %arg4: memref<1x64xf32, #tpu.memory_space<vmem>>, %arg5: memref<64x192xbf16, #tpu.memory_space<vmem>>, %arg6: memref<1x192xf32, #tpu.memory_space<vmem>>, %arg7: memref<1x64x128xbf16, #tpu.memory_space<vmem>>, %arg8: memref<1x64x64xbf16, #tpu.memory_space<vmem>>) attributes {dimension_semantics = [#tpu.dimension_semantics<parallel>, #tpu.dimension_semantics<parallel>], iteration_bounds = array<i64: 2, 1>, scalar_prefetch = 0 : i64, scratch_operands = 0 : i64, tpu.core_type = #tpu.core_type<tc>, window_params = [{transform_indices = @transform_0, window_bounds = array<i64: 1, 64, 64>}, {pipeline_mode = #tpu.pipeline_mode<synchronous>, transform_indices = @transform_1, window_bounds = array<i64: 1, 64>}, {pipeline_mode = #tpu.pipeline_mode<synchronous>, transform_indices = @transform_2, window_bounds = array<i64: 1, 64>}, {pipeline_mode = #tpu.pipeline_mode<synchronous>, transform_indices = @transform_3, window_bounds = array<i64: 64, 192>}, {pipeline_mode = #tpu.pipeline_mode<synchronous>, transform_indices = @transform_4, window_bounds = array<i64: 1, 192>}, {transform_indices = @transform_5, window_bounds = array<i64: 1, 64, 128>}, {transform_indices = @transform_6, window_bounds = array<i64: 1, 64, 64>}]} {
    %c0 = arith.constant 0 : index
    %c0_0 = arith.constant 0 : index
    %c0_1 = arith.constant 0 : index
    %0 = vector.load %arg2[%c0, %c0_0, %c0_1] : memref<1x64x64xbf16, #tpu.memory_space<vmem>>, vector<1x64x64xbf16>
    %1 = vector.shape_cast %0 : vector<1x64x64xbf16> to vector<64x64xbf16>
    %2 = arith.extf %1 : vector<64x64xbf16> to vector<64x64xf32>
    %c0_2 = arith.constant 0 : index
    %c0_3 = arith.constant 0 : index
    %3 = vector.load %arg3[%c0_2, %c0_3] : memref<1x64xf32, #tpu.memory_space<vmem>>, vector<1x64xf32>
    %c0_4 = arith.constant 0 : index
    %c0_5 = arith.constant 0 : index
    %4 = vector.load %arg4[%c0_4, %c0_5] : memref<1x64xf32, #tpu.memory_space<vmem>>, vector<1x64xf32>
    %cst = arith.constant dense<0.000000e+00> : vector<64xf32>
    %5 = vector.multi_reduction <add>, %2, %cst [1] : vector<64x64xf32> to vector<64xf32>
    %6 = vector.shape_cast %5 : vector<64xf32> to vector<64x1xf32>
    %cst_6 = arith.constant 6.400000e+01 : f32
    %7 = vector.broadcast %cst_6 : f32 to vector<64x1xf32>
    %8 = arith.divf %6, %7 : vector<64x1xf32>
    %9 = vector.broadcast %8 : vector<64x1xf32> to vector<64x64xf32>
    %10 = arith.subf %2, %9 : vector<64x64xf32>
    %11 = arith.mulf %10, %10 : vector<64x64xf32>
    %cst_7 = arith.constant dense<0.000000e+00> : vector<64xf32>
    %12 = vector.multi_reduction <add>, %11, %cst_7 [1] : vector<64x64xf32> to vector<64xf32>
    %13 = vector.shape_cast %12 : vector<64xf32> to vector<64x1xf32>
    %cst_8 = arith.constant 6.400000e+01 : f32
    %14 = vector.broadcast %cst_8 : f32 to vector<64x1xf32>
    %15 = arith.divf %13, %14 : vector<64x1xf32>
    %16 = vector.broadcast %8 : vector<64x1xf32> to vector<64x64xf32>
    %17 = arith.subf %2, %16 : vector<64x64xf32>
    %cst_9 = arith.constant 9.99999974E-6 : f32
    %18 = vector.broadcast %cst_9 : f32 to vector<64x1xf32>
    %19 = arith.addf %15, %18 : vector<64x1xf32>
    %20 = math.rsqrt %19 : vector<64x1xf32>
    %21 = vector.broadcast %20 : vector<64x1xf32> to vector<64x64xf32>
    %22 = arith.mulf %17, %21 : vector<64x64xf32>
    %23 = vector.broadcast %3 : vector<1x64xf32> to vector<64x64xf32>
    %24 = arith.mulf %22, %23 : vector<64x64xf32>
    %25 = vector.broadcast %4 : vector<1x64xf32> to vector<64x64xf32>
    %26 = arith.addf %24, %25 : vector<64x64xf32>
    %27 = arith.truncf %26 : vector<64x64xf32> to vector<64x64xbf16>
    %c0_10 = arith.constant 0 : index
    %c0_11 = arith.constant 0 : index
    %28 = vector.load %arg5[%c0_10, %c0_11] : memref<64x192xbf16, #tpu.memory_space<vmem>>, vector<64x192xbf16>
    %cst_12 = arith.constant dense<0.000000e+00> : vector<64x192xf32>
    %29 = tpu.matmul %27, %28, %cst_12 {dimension_numbers = #tpu.dot_dimension_numbers<[1], [0], [0], [1], [0, 0, 1, 1], [], []>} : vector<64x64xbf16>, vector<64x192xbf16>, vector<64x192xf32> -> vector<64x192xf32>
    %c0_13 = arith.constant 0 : index
    %c0_14 = arith.constant 0 : index
    %30 = vector.load %arg6[%c0_13, %c0_14] : memref<1x192xf32, #tpu.memory_space<vmem>>, vector<1x192xf32>
    %31 = vector.broadcast %30 : vector<1x192xf32> to vector<64x192xf32>
    %32 = arith.addf %29, %31 : vector<64x192xf32>
    %33 = vector.extract_strided_slice %32 {offsets = [0, 0], sizes = [64, 128], strides = [1, 1]} : vector<64x192xf32> to vector<64x128xf32>
    %34 = arith.truncf %33 : vector<64x128xf32> to vector<64x128xbf16>
    %c0_15 = arith.constant 0 : index
    %c0_16 = arith.constant 0 : index
    %c0_17 = arith.constant 0 : index
    %35 = vector.load %arg7[%c0_15, %c0_16, %c0_17] : memref<1x64x128xbf16, #tpu.memory_space<vmem>>, vector<1x64x128xbf16>
    %36 = vector.shape_cast %35 : vector<1x64x128xbf16> to vector<64x128xbf16>
    %37 = vector.shape_cast %34 : vector<64x128xbf16> to vector<1x64x128xbf16>
    tpu.vector_store %arg7[%c0_15, %c0_16, %c0_17], %37 {strides = array<i32>} : memref<1x64x128xbf16, #tpu.memory_space<vmem>>, vector<1x64x128xbf16>,
    %38 = vector.extract_strided_slice %32 {offsets = [0, 128], sizes = [64, 64], strides = [1, 1]} : vector<64x192xf32> to vector<64x64xf32>
    %cst_18 = arith.constant 2.500000e-01 : f32
    %39 = vector.broadcast %cst_18 : f32 to vector<64x64xf32>
    %40 = arith.mulf %38, %39 : vector<64x64xf32>
    %41 = arith.truncf %40 : vector<64x64xf32> to vector<64x64xbf16>
    %c0_19 = arith.constant 0 : index
    %c0_20 = arith.constant 0 : index
    %c0_21 = arith.constant 0 : index
    %42 = vector.load %arg8[%c0_19, %c0_20, %c0_21] : memref<1x64x64xbf16, #tpu.memory_space<vmem>>, vector<1x64x64xbf16>
    %43 = vector.shape_cast %42 : vector<1x64x64xbf16> to vector<64x64xbf16>
    %44 = vector.shape_cast %41 : vector<64x64xbf16> to vector<1x64x64xbf16>
    tpu.vector_store %arg8[%c0_19, %c0_20, %c0_21], %44 {strides = array<i32>} : memref<1x64x64xbf16, #tpu.memory_space<vmem>>, vector<1x64x64xbf16>,
    return
  }
  func.func @transform_0(%arg0: i32, %arg1: i32) -> (i32, i32, i32) {
    %c0_i32 = arith.constant 0 : i32
    %c0_i32_0 = arith.constant 0 : i32
    return %arg0, %arg1, %c0_i32 : i32, i32, i32
  }
  func.func @transform_1(%arg0: i32, %arg1: i32) -> (i32, i32) {
    %c0_i32 = arith.constant 0 : i32
    %c0_i32_0 = arith.constant 0 : i32
    %c0_i32_1 = arith.constant 0 : i32
    return %c0_i32, %c0_i32_0 : i32, i32
  }
  func.func @transform_2(%arg0: i32, %arg1: i32) -> (i32, i32) {
    %c0_i32 = arith.constant 0 : i32
    %c0_i32_0 = arith.constant 0 : i32
    %c0_i32_1 = arith.constant 0 : i32
    return %c0_i32, %c0_i32_0 : i32, i32
  }
  func.func @transform_3(%arg0: i32, %arg1: i32) -> (i32, i32) {
    %c0_i32 = arith.constant 0 : i32
    %c0_i32_0 = arith.constant 0 : i32
    %c0_i32_1 = arith.constant 0 : i32
    return %c0_i32, %c0_i32_0 : i32, i32
  }
  func.func @transform_4(%arg0: i32, %arg1: i32) -> (i32, i32) {
    %c0_i32 = arith.constant 0 : i32
    %c0_i32_0 = arith.constant 0 : i32
    %c0_i32_1 = arith.constant 0 : i32
    return %c0_i32, %c0_i32_0 : i32, i32
  }
  func.func @transform_5(%arg0: i32, %arg1: i32) -> (i32, i32, i32) {
    %c0_i32 = arith.constant 0 : i32
    %c0_i32_0 = arith.constant 0 : i32
    return %arg0, %arg1, %c0_i32 : i32, i32, i32
  }
  func.func @transform_6(%arg0: i32, %arg1: i32) -> (i32, i32, i32) {
    %c0_i32 = arith.constant 0 : i32
    %c0_i32_0 = arith.constant 0 : i32
    return %arg0, %arg1, %c0_i32 : i32, i32, i32
  }
}

</mosaic_0001>

<llo_original>
// kernel: tpu_custom_call.1
$region0: #{tpu_custom_call.1}
  #allocation0 [shape = 'u32[]', space=smem, size = 0x4, offset = 0x4, fixed_abs, tag = 'smem constant byte address 0x4 - core index']
  #allocation1 [shape = 'u32[72,128]{1,0:T(1,128)}', space=vmem, size = 0x9000, scoped, tag = 'internal scratch']
  %s0 = inlined_call_operand.hbm [shape: bf16[2,64,64], index: 0, kind: input, shape index: {}]
  %s1 = inlined_call_operand.hbm [shape: f32[1,64], index: 1, kind: input, shape index: {}]
  %s2 = inlined_call_operand.vmem [shape: f32[1,64], index: 2, kind: input, shape index: {}]
  %s3 = inlined_call_operand.hbm [shape: bf16[64,192], index: 3, kind: input, shape index: {}]
  %s4 = inlined_call_operand.vmem [shape: f32[1,192], index: 4, kind: input, shape index: {}]
  %s5 = inlined_call_operand.hbm [shape: bf16[2,64,128], index: 5, kind: output, shape index: {0}]
  %s6 = inlined_call_operand.hbm [shape: bf16[2,64,64], index: 6, kind: output, shape index: {1}]
  %7 = xla_tuple %s5, %s6
  %s8 = sld [smem:[#allocation0]]
  $region73: #{tpu_custom_call.1} parent=0
    _
  %s10 = ssub.s32 1, %s8
  %s11 = scalar_select 0, %s10, %s8
  $region1: #{tpu_custom_call.1} parent=0
    #allocation2 [shape = 'u8[32768]{0}', space=vmem, size = 0x8000, scoped, tag = 'input window, operand 0']
    #allocation3 [shape = 's32[2]{0}', space=sflag, size = 0x8, scoped, tag = 'scoped memory for tpu_custom_call.1']
    #allocation4 [shape = 's32[2]{0}', space=sflag, size = 0x8, scoped, tag = 'scoped memory for tpu_custom_call.1']
    #allocation5 [shape = 'u8[512]{0}', space=vmem, size = 0x400, scoped, tag = 'input window, operand 1, single buffered']
    #allocation6 [shape = 's32[1]{0}', space=sflag, size = 0x4, scoped, tag = 'scoped memory for tpu_custom_call.1']
    #allocation7 [shape = 'u8[32768]{0}', space=vmem, size = 0x8000, scoped, tag = 'input window, operand 3, single buffered']
    #allocation8 [shape = 'u8[32768]{0}', space=vmem, size = 0x8000, scoped, tag = 'output window, operand 0']
    #allocation9 [shape = 'u8[32768]{0}', space=vmem, size = 0x8000, scoped, tag = 'output window, operand 1']
    #allocation10 [shape = 's32[2]{0}', space=sflag, size = 0x8, scoped, tag = 'scoped memory for tpu_custom_call.1']
    %12 = vsyncpa [#allocation3], 0
    %s13 = scalar_lea.sflag [#allocation3], 1
    %14 = vsyncpa %s13, 0
    %15 = vsyncpa [#allocation6], 0
    %16 = vsyncpa [#allocation4], 0
    %s17 = scalar_lea.sflag [#allocation4], 1
    %18 = vsyncpa %s17, 0
    %19 = vsyncpa [#allocation10], 0
    %s20 = scalar_lea.sflag [#allocation10], 1
    %21 = vsyncpa %s20, 0
    loop: start=0, step=1, limit=4
    $region2: #{tpu_custom_call.1} parent=1 // loop_pre_header
      _
    $region3: #{tpu_custom_call.1} parent=1 // loop_header
      %s23 = sphi 0, %s27
      %p24 = scmp.ge.s32.totalorder %s23, 4
      %s30 = sphi 0, %s42
      %s31 = sphi 0, %s38
      %s32 = sphi 0, %s30
      %s33 = sphi 0, %s31
      %s34 = sphi 0, %s32
      %s35 = sphi 0, %s33
      %s47 = sphi 0, %s49
      %s50 = sphi 0, %s47
      %s51 = sphi 0, %s50
      %s67 = sphi 0, %s51
      %s71 = sphi 0, %s71
      %s73 = sphi 0, %s71
      %s74 = sphi 0, %s73
      %s88 = sphi 0, %s74
      %s92 = sphi 0, %s92
      %s94 = sphi 0, %s92
      %s95 = sphi 0, %s94
      %s109 = sphi 0, %s95
      %s113 = sphi 0, %s113
      %s115 = sphi 0, %s113
      %s116 = sphi 0, %s115
      %s130 = sphi 0, %s116
      %s134 = sphi 0, %s134
      %s136 = sphi 0, %s134
      %s137 = sphi 0, %s136
      %s151 = sphi 0, %s137
      %s159 = sphi 0, %s161
      %s162 = sphi 0, %s159
      %s163 = sphi 0, %s162
      %s179 = sphi 0, %s163
      %s187 = sphi 0, %s189
      %s190 = sphi 0, %s187
      %s191 = sphi 0, %s190
      %s207 = sphi 0, %s191
    $region4: #{tpu_custom_call.1} parent=1 // loop_header_branch
      %26 = sbr.rel (%p24) target = $region8
    $region5: #{tpu_custom_call.1} parent=1 // loop_body
      %s28 = ssub.s32 %s23, 1
      %s29 = ssub.s32 %s23, 2
      %s36 = sadd.s32 1, %s31
      %p37 = scmp.ge.s32.totalorder %s36, 1
      %s38 = scalar_select %p37, 0, %s36
      %s39 = sadd.s32 1, %s30
      %s40 = scalar_select %p37, %s39, %s30
      %p41 = scmp.ge.s32.totalorder %s40, 2
      %s42 = scalar_select %p41, 0, %s40
      %s43 = ssub.s32 %s30, %s42
      %s44 = ssub.s32 %s31, %s38
      %s45 = sor.u32 %s43, %s44
      %p46 = scmp.eq.s32.totalorder %s45, 0
      %s48 = sadd.s32 %s47, 1
      %s49 = scalar_select %p46, %s47, %s48
      %p52 = pneg %p46
      %p53 = scmp.eq.s32.totalorder %s23, 1
      %p54 = por %p52, %p53
      %p55 = scmp.ne.s32.totalorder %s47, %s50
      %p56 = scmp.eq.s32.totalorder %s23, 0
      %p57 = por %p55, %p56
      %p58 = scmp.ne.s32.totalorder %s47, %s50
      %p59 = scmp.eq.s32.totalorder %s28, 1
      %p60 = por %p58, %p59
      %p61 = scmp.ne.s32.totalorder %s50, %s51
      %p62 = scmp.eq.s32.totalorder %s28, 0
      %p63 = por %p61, %p62
      %p64 = scmp.ne.s32.totalorder %s50, %s51
      %p65 = scmp.eq.s32.totalorder %s29, 1
      %p66 = por %p64, %p65
      %p68 = scmp.ne.s32.totalorder %s51, %s67
      %p69 = scmp.eq.s32.totalorder %s29, 0
      %p70 = por %p68, %p69
      %s72 = sadd.s32 %s71, 1
      %p75 = scmp.eq.s32.totalorder %s23, 1
      %p76 = scmp.ne.s32.totalorder %s71, %s73
      %p77 = scmp.eq.s32.totalorder %s23, 0
      %p78 = por %p76, %p77
      %p79 = scmp.ne.s32.totalorder %s71, %s73
      %p80 = scmp.eq.s32.totalorder %s28, 1
      %p81 = por %p79, %p80
      %p82 = scmp.ne.s32.totalorder %s73, %s74
      %p83 = scmp.eq.s32.totalorder %s28, 0
      %p84 = por %p82, %p83
      %p85 = scmp.ne.s32.totalorder %s73, %s74
      %p86 = scmp.eq.s32.totalorder %s29, 1
      %p87 = por %p85, %p86
      %p89 = scmp.ne.s32.totalorder %s74, %s88
      %p90 = scmp.eq.s32.totalorder %s29, 0
      %p91 = por %p89, %p90
      %s93 = sadd.s32 %s92, 1
      %p96 = scmp.eq.s32.totalorder %s23, 1
      %p97 = scmp.ne.s32.totalorder %s92, %s94
      %p98 = scmp.eq.s32.totalorder %s23, 0
      %p99 = por %p97, %p98
      %p100 = scmp.ne.s32.totalorder %s92, %s94
      %p101 = scmp.eq.s32.totalorder %s28, 1
      %p102 = por %p100, %p101
      %p103 = scmp.ne.s32.totalorder %s94, %s95
      %p104 = scmp.eq.s32.totalorder %s28, 0
      %p105 = por %p103, %p104
      %p106 = scmp.ne.s32.totalorder %s94, %s95
      %p107 = scmp.eq.s32.totalorder %s29, 1
      %p108 = por %p106, %p107
      %p110 = scmp.ne.s32.totalorder %s95, %s109
      %p111 = scmp.eq.s32.totalorder %s29, 0
      %p112 = por %p110, %p111
      %s114 = sadd.s32 %s113, 1
      %p117 = scmp.eq.s32.totalorder %s23, 1
      %p118 = scmp.ne.s32.totalorder %s113, %s115
      %p119 = scmp.eq.s32.totalorder %s23, 0
      %p120 = por %p118, %p119
      %p121 = scmp.ne.s32.totalorder %s113, %s115
      %p122 = scmp.eq.s32.totalorder %s28, 1
      %p123 = por %p121, %p122
      %p124 = scmp.ne.s32.totalorder %s115, %s116
      %p125 = scmp.eq.s32.totalorder %s28, 0
      %p126 = por %p124, %p125
      %p127 = scmp.ne.s32.totalorder %s115, %s116
      %p128 = scmp.eq.s32.totalorder %s29, 1
      %p129 = por %p127, %p128
      %p131 = scmp.ne.s32.totalorder %s116, %s130
      %p132 = scmp.eq.s32.totalorder %s29, 0
      %p133 = por %p131, %p132
      %s135 = sadd.s32 %s134, 1
      %p138 = scmp.eq.s32.totalorder %s23, 1
      %p139 = scmp.ne.s32.totalorder %s134, %s136
      %p140 = scmp.eq.s32.totalorder %s23, 0
      %p141 = por %p139, %p140
      %p142 = scmp.ne.s32.totalorder %s134, %s136
      %p143 = scmp.eq.s32.totalorder %s28, 1
      %p144 = por %p142, %p143
      %p145 = scmp.ne.s32.totalorder %s136, %s137
      %p146 = scmp.eq.s32.totalorder %s28, 0
      %p147 = por %p145, %p146
      %p148 = scmp.ne.s32.totalorder %s136, %s137
      %p149 = scmp.eq.s32.totalorder %s29, 1
      %p150 = por %p148, %p149
      %p152 = scmp.ne.s32.totalorder %s137, %s151
      %p153 = scmp.eq.s32.totalorder %s29, 0
      %p154 = por %p152, %p153
      %s155 = ssub.s32 %s30, %s42
      %s156 = ssub.s32 %s31, %s38
      %s157 = sor.u32 %s155, %s156
      %p158 = scmp.eq.s32.totalorder %s157, 0
      %s160 = sadd.s32 %s159, 1
      %s161 = scalar_select %p158, %s159, %s160
      %p164 = pneg %p158
      %p165 = scmp.eq.s32.totalorder %s23, 1
      %p166 = por %p164, %p165
      %p167 = scmp.ne.s32.totalorder %s159, %s162
      %p168 = scmp.eq.s32.totalorder %s23, 0
      %p169 = por %p167, %p168
      %p170 = scmp.ne.s32.totalorder %s159, %s162
      %p171 = scmp.eq.s32.totalorder %s28, 1
      %p172 = por %p170, %p171
      %p173 = scmp.ne.s32.totalorder %s162, %s163
      %p174 = scmp.eq.s32.totalorder %s28, 0
      %p175 = por %p173, %p174
      %p176 = scmp.ne.s32.totalorder %s162, %s163
      %p177 = scmp.eq.s32.totalorder %s29, 1
      %p178 = por %p176, %p177
      %p180 = scmp.ne.s32.totalorder %s163, %s179
      %p181 = scmp.eq.s32.totalorder %s29, 0
      %p182 = por %p180, %p181
      %s183 = ssub.s32 %s30, %s42
      %s184 = ssub.s32 %s31, %s38
      %s185 = sor.u32 %s183, %s184
      %p186 = scmp.eq.s32.totalorder %s185, 0
      %s188 = sadd.s32 %s187, 1
      %s189 = scalar_select %p186, %s187, %s188
      %p192 = pneg %p186
      %p193 = scmp.eq.s32.totalorder %s23, 1
      %p194 = por %p192, %p193
      %p195 = scmp.ne.s32.totalorder %s187, %s190
      %p196 = scmp.eq.s32.totalorder %s23, 0
      %p197 = por %p195, %p196
      %p198 = scmp.ne.s32.totalorder %s187, %s190
      %p199 = scmp.eq.s32.totalorder %s28, 1
      %p200 = por %p198, %p199
      %p201 = scmp.ne.s32.totalorder %s190, %s191
      %p202 = scmp.eq.s32.totalorder %s28, 0
      %p203 = por %p201, %p202
      %p204 = scmp.ne.s32.totalorder %s190, %s191
      %p205 = scmp.eq.s32.totalorder %s29, 1
      %p206 = por %p204, %p205
      %p208 = scmp.ne.s32.totalorder %s191, %s207
      %p209 = scmp.eq.s32.totalorder %s29, 0
      %p210 = por %p208, %p209
      %p211 = scmp.le.s32.totalorder 1, %s23
      %p212 = scmp.lt.s32.totalorder %s23, 3
      %p213 = pnand %p211, %p212
      %p214 = pneg %p213
      // Predicated region
      $region9: #{tpu_custom_call.1} parent=5 // pred_check
        _
      $region10: #{tpu_custom_call.1} parent=5 // pred_check_branch
        %216 = sbr.rel (%p213) target = $region12
      $region11: #{tpu_custom_call.1} parent=5 // pred_region
        %s217 = ssub.s32 %s23, 1
        // Predicated region
        $region13: #{tpu_custom_call.1} parent=11 // pred_check
          %p218 = pneg %p84
        $region14: #{tpu_custom_call.1} parent=11 // pred_check_branch
          %220 = sbr.rel (%p218) target = $region16
        $region15: #{tpu_custom_call.1} parent=11 // pred_region
          %222 = vsyncadd [#allocation6], 0
          %s224 = sshll.u32 %s1, 4
          %s225 = int_to_ptr.hbm [resolvable:$true] %s224
          %s226 = sshll.u32 [#allocation5], 4
          %s227 = int_to_ptr.vmem [resolvable:$true] %s226
          %229 = dma.hbm_to_vmem [thread:$0]  %s225, 16, %s227, [#allocation6]
        $region16: #{tpu_custom_call.1} parent=11 // pred_fallthru
          _
        // Predicated region
        $region17: #{tpu_custom_call.1} parent=11 // pred_check
          %p230 = pneg %p105
        $region18: #{tpu_custom_call.1} parent=11 // pred_check_branch
          %232 = sbr.rel (%p230) target = $region20
        $region19: #{tpu_custom_call.1} parent=11 // pred_region
          _
        $region20: #{tpu_custom_call.1} parent=11 // pred_fallthru
          _
        // Predicated region
        $region21: #{tpu_custom_call.1} parent=11 // pred_check
          %p233 = pneg %p126
        $region22: #{tpu_custom_call.1} parent=11 // pred_check_branch
          %235 = sbr.rel (%p233) target = $region24
        $region23: #{tpu_custom_call.1} parent=11 // pred_region
          %237 = vsyncadd [#allocation6], 0
          %s238 = sshll.u32 %s3, 4
          %s239 = int_to_ptr.hbm [resolvable:$true] %s238
          %s240 = sshll.u32 [#allocation7], 4
          %s241 = int_to_ptr.vmem [resolvable:$true] %s240
          %246 = dma.hbm_to_vmem [thread:$0]  %s239, 1024, %s241, [#allocation6], 128, 128, 8
        $region24: #{tpu_custom_call.1} parent=11 // pred_fallthru
          _
        // Predicated region
        $region25: #{tpu_custom_call.1} parent=11 // pred_check
          %p247 = pneg %p147
        $region26: #{tpu_custom_call.1} parent=11 // pred_check_branch
          %249 = sbr.rel (%p247) target = $region28
        $region27: #{tpu_custom_call.1} parent=11 // pred_region
          _
        $region28: #{tpu_custom_call.1} parent=11 // pred_fallthru
          _
      $region12: #{tpu_custom_call.1} parent=5 // pred_fallthru
        _
      %p250 = scmp.lt.s32.totalorder %s23, 2
      // Predicated region
      $region29: #{tpu_custom_call.1} parent=5 // pred_check
        %p251 = pneg %p250
      $region30: #{tpu_custom_call.1} parent=5 // pred_check_branch
        %253 = sbr.rel (%p251) target = $region32
      $region31: #{tpu_custom_call.1} parent=5 // pred_region
        // Predicated region
        $region33: #{tpu_custom_call.1} parent=31 // pred_check
          %p254 = pneg %p57
        $region34: #{tpu_custom_call.1} parent=31 // pred_check_branch
          %256 = sbr.rel (%p254) target = $region36
        $region35: #{tpu_custom_call.1} parent=31 // pred_region
          %s257 = sand.u32 %s47, 1
          %s258 = scalar_lea.sflag [#allocation3], %s257
          %s259 = sand.u32 %s47, 1
          %s260 = smul.addr %s259, 32
          %s261 = scalar_lea.vmem [#allocation2], %s260
          %s262 = smul.u32 8, %s31
          %264 = vsyncadd %s258, 0
          %s265 = smul.addr %s30, 8
          %s266 = sadd.s32 %s262, %s265
          %s267 = smul.addr %s266, 4
          %s268 = scalar_lea.hbm %s0, %s267
          %s269 = sshll.u32 %s268, 4
          %s270 = int_to_ptr.hbm [resolvable:$true] %s269
          %s271 = sshll.u32 %s261, 4
          %s272 = int_to_ptr.vmem [resolvable:$true] %s271
          %277 = dma.hbm_to_vmem [thread:$0]  %s270, 512, %s272, %s258, 64, 64, 4
        $region36: #{tpu_custom_call.1} parent=31 // pred_fallthru
          _
      $region32: #{tpu_custom_call.1} parent=5 // pred_fallthru
        _
      %p278 = scmp.le.s32.totalorder 1, %s23
      %p279 = scmp.lt.s32.totalorder %s23, 3
      %p280 = pnand %p278, %p279
      %p281 = pneg %p280
      // Predicated region
      $region37: #{tpu_custom_call.1} parent=5 // pred_check
        _
      $region38: #{tpu_custom_call.1} parent=5 // pred_check_branch
        %283 = sbr.rel (%p280) target = $region40
      $region39: #{tpu_custom_call.1} parent=5 // pred_region
        %s284 = ssub.s32 %s23, 1
        %s285 = sand.u32 %s50, 1
        %s286 = scalar_lea.sflag [#allocation3], %s285
        %s287 = sand.u32 %s50, 1
        %s288 = smul.addr %s287, 32
        %s289 = scalar_lea.vmem [#allocation2], %s288
        // Predicated region
        $region41: #{tpu_custom_call.1} parent=39 // pred_check
          %p290 = pneg %p63
        $region42: #{tpu_custom_call.1} parent=39 // pred_check_branch
          %292 = sbr.rel (%p290) target = $region44
        $region43: #{tpu_custom_call.1} parent=39 // pred_region
          %294 = dma.done %s286, 512
        $region44: #{tpu_custom_call.1} parent=39 // pred_fallthru
          _
        // Predicated region
        $region45: #{tpu_custom_call.1} parent=39 // pred_check
          %p295 = pneg %p84
        $region46: #{tpu_custom_call.1} parent=39 // pred_check_branch
          %297 = sbr.rel (%p295) target = $region48
        $region47: #{tpu_custom_call.1} parent=39 // pred_region
          %299 = dma.done [#allocation6], 16
        $region48: #{tpu_custom_call.1} parent=39 // pred_fallthru
          _
        // Predicated region
        $region49: #{tpu_custom_call.1} parent=39 // pred_check
          %p300 = pneg %p126
        $region50: #{tpu_custom_call.1} parent=39 // pred_check_branch
          %302 = sbr.rel (%p300) target = $region52
        $region51: #{tpu_custom_call.1} parent=39 // pred_region
          %304 = dma.done [#allocation6], 1024
        $region52: #{tpu_custom_call.1} parent=39 // pred_fallthru
          _
        %s305 = sand.u32 %s50, 1
        %s306 = scalar_lea.sflag [#allocation3], %s305
        %s307 = sand.u32 %s50, 1
        %s308 = smul.addr %s307, 32
        %s309 = scalar_lea.vmem [#allocation2], %s308
        %p310 = pneg %p63
        %p311 = pneg %p60
        %p312 = pneg %p84
        %p313 = pneg %p81
        %p314 = pneg %p105
        %p315 = pneg %p102
        %p316 = pneg %p126
        %p317 = pneg %p123
        %p318 = pneg %p147
        %p319 = pneg %p144
        %p320 = pneg %p175
        %p321 = pneg %p172
        %s322 = sand.u32 %s162, 1
        %s323 = scalar_lea.sflag [#allocation4], %s322
        %s324 = sand.u32 %s162, 1
        %s325 = smul.addr %s324, 32
        %s326 = scalar_lea.vmem [#allocation8], %s325
        %p327 = pneg %p203
        %p328 = pneg %p200
        %s329 = sand.u32 %s190, 1
        %s330 = scalar_lea.sflag [#allocation10], %s329
        %s331 = sand.u32 %s190, 1
        %s332 = smul.addr %s331, 32
        %s333 = scalar_lea.vmem [#allocation9], %s332
        %s334 = smul.u32 8, %s33
        %s335 = smul.u32 8, %s33
        %s336 = smul.u32 8, %s33
        %v338 = vld [vmem:[%s289] sm:$0xf]
        %v339 = vld [vmem:[%s289 + $0x4] sm:$0xf]
        %v340 = vld [vmem:[%s289 + $0x8] sm:$0xf]
        %v341 = vld [vmem:[%s289 + $0xc] sm:$0xf]
        %v342 = vld [vmem:[%s289 + $0x10] sm:$0xf]
        %v343 = vld [vmem:[%s289 + $0x14] sm:$0xf]
        %v344 = vld [vmem:[%s289 + $0x18] sm:$0xf]
        %v345 = vld [vmem:[%s289 + $0x1c] sm:$0xf]
        %v346 = vunpack.c.l.bf16 %v338
        %v347 = vunpack.c.l.bf16 %v339
        %v348 = vunpack.c.l.bf16 %v340
        %v349 = vunpack.c.l.bf16 %v341
        %v350 = vunpack.c.l.bf16 %v342
        %v351 = vunpack.c.l.bf16 %v343
        %v352 = vunpack.c.l.bf16 %v344
        %v353 = vunpack.c.l.bf16 %v345
        %v354 = vld [vmem:[#allocation5] sm:$0x1]
        %v355 = vld [vmem:[%s2] sm:$0x1]
        %vm356 = vcmask 523264
        %v357 = vsel %vm356, %v346, 0.0
        %358 = vadd.xlane.f32.xlu0 %v357
        %v359 = vpop.xlane.xlu0 %358
        %v360 = vsel %vm356, %v347, 0.0
        %361 = vadd.xlane.f32.xlu0 %v360
        %v362 = vpop.xlane.xlu0 %361
        %v363 = vsel %vm356, %v348, 0.0
        %364 = vadd.xlane.f32.xlu0 %v363
        %v365 = vpop.xlane.xlu0 %364
        %v366 = vsel %vm356, %v349, 0.0
        %367 = vadd.xlane.f32.xlu0 %v366
        %v368 = vpop.xlane.xlu0 %367
        %v369 = vsel %vm356, %v350, 0.0
        %370 = vadd.xlane.f32.xlu0 %v369
        %v371 = vpop.xlane.xlu0 %370
        %v372 = vsel %vm356, %v351, 0.0
        %373 = vadd.xlane.f32.xlu0 %v372
        %v374 = vpop.xlane.xlu0 %373
        %v375 = vsel %vm356, %v352, 0.0
        %376 = vadd.xlane.f32.xlu0 %v375
        %v377 = vpop.xlane.xlu0 %376
        %v378 = vsel %vm356, %v353, 0.0
        %379 = vadd.xlane.f32.xlu0 %v378
        %v380 = vpop.xlane.xlu0 %379
        %v381 = vrcp.pop 64.0
        %v382 = vmul.f32 64.0, %v381
        %v383 = vsub.f32 1.0, %v382
        %v384 = vmul.f32 %v381, %v383
        %v385 = vadd.f32 %v381, %v384
        %vm386 = vweird.f32 %v381
        %v387 = vsel %vm386, %v381, %v385
        %v388 = vmul.f32 %v359, %v387
        %v389 = vmul.f32 %v362, %v387
        %v390 = vmul.f32 %v365, %v387
        %v391 = vmul.f32 %v368, %v387
        %v392 = vmul.f32 %v371, %v387
        %v393 = vmul.f32 %v374, %v387
        %v394 = vmul.f32 %v377, %v387
        %v395 = vmul.f32 %v380, %v387
        %v396 = vsub.f32 %v346, %v388
        %v397 = vsub.f32 %v347, %v389
        %v398 = vsub.f32 %v348, %v390
        %v399 = vsub.f32 %v349, %v391
        %v400 = vsub.f32 %v350, %v392
        %v401 = vsub.f32 %v351, %v393
        %v402 = vsub.f32 %v352, %v394
        %v403 = vsub.f32 %v353, %v395
        %v404 = vmul.f32 %v396, %v396
        %v405 = vmul.f32 %v397, %v397
        %v406 = vmul.f32 %v398, %v398
        %v407 = vmul.f32 %v399, %v399
        %v408 = vmul.f32 %v400, %v400
        %v409 = vmul.f32 %v401, %v401
        %v410 = vmul.f32 %v402, %v402
        %v411 = vmul.f32 %v403, %v403
        %v412 = vsel %vm356, %v404, 0.0
        %413 = vadd.xlane.f32.xlu0 %v412
        %v414 = vpop.xlane.xlu0 %413
        %v415 = vsel %vm356, %v405, 0.0
        %416 = vadd.xlane.f32.xlu0 %v415
        %v417 = vpop.xlane.xlu0 %416
        %v418 = vsel %vm356, %v406, 0.0
        %419 = vadd.xlane.f32.xlu0 %v418
        %v420 = vpop.xlane.xlu0 %419
        %v421 = vsel %vm356, %v407, 0.0
        %422 = vadd.xlane.f32.xlu0 %v421
        %v423 = vpop.xlane.xlu0 %422
        %v424 = vsel %vm356, %v408, 0.0
        %425 = vadd.xlane.f32.xlu0 %v424
        %v426 = vpop.xlane.xlu0 %425
        %v427 = vsel %vm356, %v409, 0.0
        %428 = vadd.xlane.f32.xlu0 %v427
        %v429 = vpop.xlane.xlu0 %428
        %v430 = vsel %vm356, %v410, 0.0
        %431 = vadd.xlane.f32.xlu0 %v430
        %v432 = vpop.xlane.xlu0 %431
        %v433 = vsel %vm356, %v411, 0.0
        %434 = vadd.xlane.f32.xlu0 %v433
        %v435 = vpop.xlane.xlu0 %434
        %v436 = vmul.f32 %v414, %v387
        %v437 = vmul.f32 %v417, %v387
        %v438 = vmul.f32 %v420, %v387
        %v439 = vmul.f32 %v423, %v387
        %v440 = vmul.f32 %v426, %v387
        %v441 = vmul.f32 %v429, %v387
        %v442 = vmul.f32 %v432, %v387
        %v443 = vmul.f32 %v435, %v387
        %v444 = vadd.f32 %v436, 1e-05
        %v445 = vadd.f32 %v437, 1e-05
        %v446 = vadd.f32 %v438, 1e-05
        %v447 = vadd.f32 %v439, 1e-05
        %v448 = vadd.f32 %v440, 1e-05
        %v449 = vadd.f32 %v441, 1e-05
        %v450 = vadd.f32 %v442, 1e-05
        %v451 = vadd.f32 %v443, 1e-05
        %v452 = vrsqrt.pop %v444
        %v453 = vmul.f32 %v452, %v444
        %v454 = vmul.f32 %v453, %v452
        %v455 = vmul.f32 0.5, %v454
        %v456 = vsub.f32 1.5, %v455
        %v457 = vmul.f32 %v452, %v456
        %vm458 = vweird.f32 %v444
        %vm459 = vweird.f32 %v452
        %vm460 = vmor %vm458, %vm459
        %v461 = vsel %vm460, %v452, %v457
        %v462 = vrsqrt.pop %v445
        %v463 = vmul.f32 %v462, %v445
        %v464 = vmul.f32 %v463, %v462
        %v465 = vmul.f32 0.5, %v464
        %v466 = vsub.f32 1.5, %v465
        %v467 = vmul.f32 %v462, %v466
        %vm468 = vweird.f32 %v445
        %vm469 = vweird.f32 %v462
        %vm470 = vmor %vm468, %vm469
        %v471 = vsel %vm470, %v462, %v467
        %v472 = vrsqrt.pop %v446
        %v473 = vmul.f32 %v472, %v446
        %v474 = vmul.f32 %v473, %v472
        %v475 = vmul.f32 0.5, %v474
        %v476 = vsub.f32 1.5, %v475
        %v477 = vmul.f32 %v472, %v476
        %vm478 = vweird.f32 %v446
        %vm479 = vweird.f32 %v472
        %vm480 = vmor %vm478, %vm479
        %v481 = vsel %vm480, %v472, %v477
        %v482 = vrsqrt.pop %v447
        %v483 = vmul.f32 %v482, %v447
        %v484 = vmul.f32 %v483, %v482
        %v485 = vmul.f32 0.5, %v484
        %v486 = vsub.f32 1.5, %v485
        %v487 = vmul.f32 %v482, %v486
        %vm488 = vweird.f32 %v447
        %vm489 = vweird.f32 %v482
        %vm490 = vmor %vm488, %vm489
        %v491 = vsel %vm490, %v482, %v487
        %v492 = vrsqrt.pop %v448
        %v493 = vmul.f32 %v492, %v448
        %v494 = vmul.f32 %v493, %v492
        %v495 = vmul.f32 0.5, %v494
        %v496 = vsub.f32 1.5, %v495
        %v497 = vmul.f32 %v492, %v496
        %vm498 = vweird.f32 %v448
        %vm499 = vweird.f32 %v492
        %vm500 = vmor %vm498, %vm499
        %v501 = vsel %vm500, %v492, %v497
        %v502 = vrsqrt.pop %v449
        %v503 = vmul.f32 %v502, %v449
        %v504 = vmul.f32 %v503, %v502
        %v505 = vmul.f32 0.5, %v504
        %v506 = vsub.f32 1.5, %v505
        %v507 = vmul.f32 %v502, %v506
        %vm508 = vweird.f32 %v449
        %vm509 = vweird.f32 %v502
        %vm510 = vmor %vm508, %vm509
        %v511 = vsel %vm510, %v502, %v507
        %v512 = vrsqrt.pop %v450
        %v513 = vmul.f32 %v512, %v450
        %v514 = vmul.f32 %v513, %v512
        %v515 = vmul.f32 0.5, %v514
        %v516 = vsub.f32 1.5, %v515
        %v517 = vmul.f32 %v512, %v516
        %vm518 = vweird.f32 %v450
        %vm519 = vweird.f32 %v512
        %vm520 = vmor %vm518, %vm519
        %v521 = vsel %vm520, %v512, %v517
        %v522 = vrsqrt.pop %v451
        %v523 = vmul.f32 %v522, %v451
        %v524 = vmul.f32 %v523, %v522
        %v525 = vmul.f32 0.5, %v524
        %v526 = vsub.f32 1.5, %v525
        %v527 = vmul.f32 %v522, %v526
        %vm528 = vweird.f32 %v451
        %vm529 = vweird.f32 %v522
        %vm530 = vmor %vm528, %vm529
        %v531 = vsel %vm530, %v522, %v527
        %v532 = vmul.f32 %v396, %v461
        %v533 = vmul.f32 %v397, %v471
        %v534 = vmul.f32 %v398, %v481
        %v535 = vmul.f32 %v399, %v491
        %v536 = vmul.f32 %v400, %v501
        %v537 = vmul.f32 %v401, %v511
        %v538 = vmul.f32 %v402, %v521
        %v539 = vmul.f32 %v403, %v531
        %v541 = vperm.slane %v354, 0
        %v543 = vmul.f32 %v532, %v541
        %v544 = vmul.f32 %v533, %v541
        %v545 = vmul.f32 %v534, %v541
        %v546 = vmul.f32 %v535, %v541
        %v547 = vmul.f32 %v536, %v541
        %v548 = vmul.f32 %v537, %v541
        %v549 = vmul.f32 %v538, %v541
        %v550 = vmul.f32 %v539, %v541
        %v552 = vperm.slane %v355, 0
        %v554 = vadd.f32 %v543, %v552
        %v555 = vadd.f32 %v544, %v552
        %v556 = vadd.f32 %v545, %v552
        %v557 = vadd.f32 %v546, %v552
        %v558 = vadd.f32 %v547, %v552
        %v559 = vadd.f32 %v548, %v552
        %v560 = vadd.f32 %v549, %v552
        %v561 = vadd.f32 %v550, %v552
        %v562 = vpack.c.bf16 %v555, %v554
        %v563 = vpack.c.bf16 %v557, %v556
        %v564 = vpack.c.bf16 %v559, %v558
        %v565 = vpack.c.bf16 %v561, %v560
        %v566 = vld [vmem:[#allocation7] sm:$0xff]
        %v567 = vld [vmem:[#allocation7 + $0x8] sm:$0xff]
        %v568 = vld [vmem:[#allocation7 + $0x10] sm:$0xff]
        %v569 = vld [vmem:[#allocation7 + $0x18] sm:$0xff]
        %v570 = vld [vmem:[#allocation7 + $0x20] sm:$0xff]
        %v571 = vld [vmem:[#allocation7 + $0x28] sm:$0xff]
        %v572 = vld [vmem:[#allocation7 + $0x30] sm:$0xff]
        %v573 = vld [vmem:[#allocation7 + $0x38] sm:$0xff]
        %v574 = vld [vmem:[%s4] sm:$0x3]
        %v576 = vperm.slane %v574, 0
        %v577 = vperm.slane %v574, 1
        %v588 = vunpack.c.l.b16 %v566
        %v589 = vunpack.c.h.b16 %v566
        %v590 = vunpack.c.l.b16 %v567
        %v591 = vunpack.c.h.b16 %v567
        %v592 = vunpack.c.l.b16 %v568
        %v593 = vunpack.c.h.b16 %v568
        %v594 = vunpack.c.l.b16 %v569
        %v595 = vunpack.c.h.b16 %v569
        %v596 = vunpack.c.l.b16 %v570
        %v597 = vunpack.c.h.b16 %v570
        %v598 = vunpack.c.l.b16 %v571
        %v599 = vunpack.c.h.b16 %v571
        %v600 = vunpack.c.l.b16 %v572
        %v601 = vunpack.c.h.b16 %v572
        %v602 = vunpack.c.l.b16 %v573
        %v603 = vunpack.c.h.b16 %v573
        %v604 = vpack.c.b16 %v590, %v588
        %v605 = vpack.c.b16 %v591, %v589
        %v606 = vpack.c.b16 %v594, %v592
        %v607 = vpack.c.b16 %v595, %v593
        %v608 = vpack.c.b16 %v598, %v596
        %v609 = vpack.c.b16 %v599, %v597
        %v610 = vpack.c.b16 %v602, %v600
        %v611 = vpack.c.b16 %v603, %v601
        %v621 = vsel %vm356, %v562, 0
        %v624 = vsel %vm356, %v563, 0
        %v627 = vsel %vm356, %v564, 0
        %v630 = vsel %vm356, %v565, 0
        %632 = vmatpush.bf16.msra.mxu0 0
        %633 = vmatpush.bf16.msra.mxu0 0
        %634 = vmatpush.bf16.msra.mxu0 0
        %635 = vmatpush.bf16.msra.mxu0 0
        %636 = vmatpush.bf16.msra.mxu0 %v610
        %637 = vmatpush.bf16.msra.mxu0 %v608
        %638 = vmatpush.bf16.msra.mxu0 %v606
        %639 = vmatpush.bf16.msra.mxu0 %v604
        %640 = vmatmul.bf16.gmra.mxu0 %v621
        %v641 = vpop.f32.mrf.mxu0
        %v642 = vadd.f32 %v576, %v641
        %v643 = vpop.f32.mrf.mxu0
        %v644 = vadd.f32 %v576, %v643
        %645 = vmatmul.bf16.gmra.mxu0 %v624
        %v646 = vpop.f32.mrf.mxu0
        %v647 = vadd.f32 %v576, %v646
        %v648 = vpop.f32.mrf.mxu0
        %v649 = vadd.f32 %v576, %v648
        %650 = vmatmul.bf16.gmra.mxu0 %v627
        %v651 = vpop.f32.mrf.mxu0
        %v652 = vadd.f32 %v576, %v651
        %v653 = vpop.f32.mrf.mxu0
        %v654 = vadd.f32 %v576, %v653
        %655 = vmatmul.bf16.gmra.mxu0 %v630
        %v656 = vpop.f32.mrf.mxu0
        %v657 = vadd.f32 %v576, %v656
        %v658 = vpop.f32.mrf.mxu0
        %v659 = vadd.f32 %v576, %v658
        %660 = vdwg.mxu0
        %661 = vmatpush.bf16.msra.mxu0 0
        %662 = vmatpush.bf16.msra.mxu0 0
        %663 = vmatpush.bf16.msra.mxu0 0
        %664 = vmatpush.bf16.msra.mxu0 0
        %665 = vmatpush.bf16.msra.mxu0 %v611
        %666 = vmatpush.bf16.msra.mxu0 %v609
        %667 = vmatpush.bf16.msra.mxu0 %v607
        %668 = vmatpush.bf16.msra.mxu0 %v605
        %669 = vmatmul.bf16.gmra.mxu0 %v621
        %v670 = vpop.f32.mrf.mxu0
        %v671 = vadd.f32 %v577, %v670
        %v672 = vpop.f32.mrf.mxu0
        %v673 = vadd.f32 %v577, %v672
        %674 = vmatmul.bf16.gmra.mxu0 %v624
        %v675 = vpop.f32.mrf.mxu0
        %v676 = vadd.f32 %v577, %v675
        %v677 = vpop.f32.mrf.mxu0
        %v678 = vadd.f32 %v577, %v677
        %679 = vmatmul.bf16.gmra.mxu0 %v627
        %v680 = vpop.f32.mrf.mxu0
        %v681 = vadd.f32 %v577, %v680
        %v682 = vpop.f32.mrf.mxu0
        %v683 = vadd.f32 %v577, %v682
        %684 = vmatmul.bf16.gmra.mxu0 %v630
        %v685 = vpop.f32.mrf.mxu0
        %v686 = vadd.f32 %v577, %v685
        %v687 = vpop.f32.mrf.mxu0
        %v688 = vadd.f32 %v577, %v687
        %689 = vdwg.mxu0
        %v690 = vpack.c.bf16 %v642, %v642
        %v691 = vpack.c.bf16 %v644, %v644
        %v692 = vpack.c.bf16 %v647, %v647
        %v693 = vpack.c.bf16 %v649, %v649
        %v694 = vpack.c.bf16 %v652, %v652
        %v695 = vpack.c.bf16 %v654, %v654
        %v696 = vpack.c.bf16 %v657, %v657
        %v697 = vpack.c.bf16 %v659, %v659
        %698 = vst [vmem:[%s326] sm:$0xf] %v690
        %699 = vst [vmem:[%s326 + $0x4] sm:$0xf] %v691
        %700 = vst [vmem:[%s326 + $0x8] sm:$0xf] %v692
        %701 = vst [vmem:[%s326 + $0xc] sm:$0xf] %v693
        %702 = vst [vmem:[%s326 + $0x10] sm:$0xf] %v694
        %703 = vst [vmem:[%s326 + $0x14] sm:$0xf] %v695
        %704 = vst [vmem:[%s326 + $0x18] sm:$0xf] %v696
        %705 = vst [vmem:[%s326 + $0x1c] sm:$0xf] %v697
        %v706 = vmul.f32 %v671, 0.25
        %v707 = vmul.f32 %v673, 0.25
        %v708 = vmul.f32 %v676, 0.25
        %v709 = vmul.f32 %v678, 0.25
        %v710 = vmul.f32 %v681, 0.25
        %v711 = vmul.f32 %v683, 0.25
        %v712 = vmul.f32 %v686, 0.25
        %v713 = vmul.f32 %v688, 0.25
        %v714 = vpack.c.bf16 %v706, %v706
        %v715 = vpack.c.bf16 %v707, %v707
        %v716 = vpack.c.bf16 %v708, %v708
        %v717 = vpack.c.bf16 %v709, %v709
        %v718 = vpack.c.bf16 %v710, %v710
        %v719 = vpack.c.bf16 %v711, %v711
        %v720 = vpack.c.bf16 %v712, %v712
        %v721 = vpack.c.bf16 %v713, %v713
        %vm722 = vcmask 519168
        %723 = vst.msk [vmem:[%s333] sm:$0xf] %vm722, %v714
        %724 = vst.msk [vmem:[%s333 + $0x4] sm:$0xf] %vm722, %v715
        %725 = vst.msk [vmem:[%s333 + $0x8] sm:$0xf] %vm722, %v716
        %726 = vst.msk [vmem:[%s333 + $0xc] sm:$0xf] %vm722, %v717
        %727 = vst.msk [vmem:[%s333 + $0x10] sm:$0xf] %vm722, %v718
        %728 = vst.msk [vmem:[%s333 + $0x14] sm:$0xf] %vm722, %v719
        %729 = vst.msk [vmem:[%s333 + $0x18] sm:$0xf] %vm722, %v720
        %730 = vst.msk [vmem:[%s333 + $0x1c] sm:$0xf] %vm722, %v721
        %s731 = sand.u32 %s162, 1
        %s732 = scalar_lea.sflag [#allocation4], %s731
        %s733 = sand.u32 %s162, 1
        %s734 = smul.addr %s733, 32
        %s735 = scalar_lea.vmem [#allocation8], %s734
        %s736 = sand.u32 %s190, 1
        %s737 = scalar_lea.sflag [#allocation10], %s736
        %s738 = sand.u32 %s190, 1
        %s739 = smul.addr %s738, 32
        %s740 = scalar_lea.vmem [#allocation9], %s739
        // Predicated region
        $region53: #{tpu_custom_call.1} parent=39 // pred_check
          %p741 = pneg %p172
        $region54: #{tpu_custom_call.1} parent=39 // pred_check_branch
          %743 = sbr.rel (%p741) target = $region56
        $region55: #{tpu_custom_call.1} parent=39 // pred_region
          %s744 = smul.u32 8, %s33
          %746 = vsyncadd %s732, 0
          %s747 = smul.addr %s32, 8
          %s748 = sadd.s32 %s744, %s747
          %s749 = smul.addr %s748, 4
          %s750 = scalar_lea.hbm %s5, %s749
          %s751 = sshll.u32 %s735, 4
          %s752 = int_to_ptr.vmem [resolvable:$true] %s751
          %s753 = sshll.u32 %s750, 4
          %s754 = int_to_ptr.hbm [resolvable:$true] %s753
          %759 = dma.vmem_to_hbm [thread:$0]  %s752, 512, %s754, %s732, 64, 64, 4
        $region56: #{tpu_custom_call.1} parent=39 // pred_fallthru
          _
        // Predicated region
        $region57: #{tpu_custom_call.1} parent=39 // pred_check
          %p760 = pneg %p200
        $region58: #{tpu_custom_call.1} parent=39 // pred_check_branch
          %762 = sbr.rel (%p760) target = $region60
        $region59: #{tpu_custom_call.1} parent=39 // pred_region
          %s763 = smul.u32 8, %s33
          %765 = vsyncadd %s737, 0
          %s766 = smul.addr %s32, 8
          %s767 = sadd.s32 %s763, %s766
          %s768 = smul.addr %s767, 4
          %s769 = scalar_lea.hbm %s6, %s768
          %s770 = sshll.u32 %s740, 4
          %s771 = int_to_ptr.vmem [resolvable:$true] %s770
          %s772 = sshll.u32 %s769, 4
          %s773 = int_to_ptr.hbm [resolvable:$true] %s772
          %778 = dma.vmem_to_hbm [thread:$0]  %s771, 512, %s773, %s737, 64, 64, 4
        $region60: #{tpu_custom_call.1} parent=39 // pred_fallthru
          _
      $region40: #{tpu_custom_call.1} parent=5 // pred_fallthru
        _
      %p779 = scmp.le.s32.totalorder 2, %s23
      // Predicated region
      $region61: #{tpu_custom_call.1} parent=5 // pred_check
        %p780 = pneg %p779
      $region62: #{tpu_custom_call.1} parent=5 // pred_check_branch
        %782 = sbr.rel (%p780) target = $region64
      $region63: #{tpu_custom_call.1} parent=5 // pred_region
        %s783 = ssub.s32 %s23, 2
        // Predicated region
        $region65: #{tpu_custom_call.1} parent=63 // pred_check
          %p784 = pneg %p178
        $region66: #{tpu_custom_call.1} parent=63 // pred_check_branch
          %786 = sbr.rel (%p784) target = $region68
        $region67: #{tpu_custom_call.1} parent=63 // pred_region
          %s787 = sand.u32 %s163, 1
          %s788 = scalar_lea.sflag [#allocation4], %s787
          %s789 = sand.u32 %s163, 1
          %s790 = smul.addr %s789, 32
          %s791 = scalar_lea.vmem [#allocation8], %s790
          %793 = dma.done %s788, 512
        $region68: #{tpu_custom_call.1} parent=63 // pred_fallthru
          _
        // Predicated region
        $region69: #{tpu_custom_call.1} parent=63 // pred_check
          %p794 = pneg %p206
        $region70: #{tpu_custom_call.1} parent=63 // pred_check_branch
          %796 = sbr.rel (%p794) target = $region72
        $region71: #{tpu_custom_call.1} parent=63 // pred_region
          %s797 = sand.u32 %s191, 1
          %s798 = scalar_lea.sflag [#allocation10], %s797
          %s799 = sand.u32 %s191, 1
          %s800 = smul.addr %s799, 32
          %s801 = scalar_lea.vmem [#allocation9], %s800
          %803 = dma.done %s798, 512
        $region72: #{tpu_custom_call.1} parent=63 // pred_fallthru
          _
      $region64: #{tpu_custom_call.1} parent=5 // pred_fallthru
        _
    $region6: #{tpu_custom_call.1} parent=1 // loop_footer
      %s27 = sadd.s32 1, %s23
    $region7: #{tpu_custom_call.1} parent=1 // loop_footer_branch
      %22 = sbr.rel target = $region3
    $region8: #{tpu_custom_call.1} parent=1 // loop_exit
      _
    %804 = vsyncpa [#allocation3], 1
    %s805 = scalar_lea.sflag [#allocation3], 1
    %806 = vsyncpa %s805, 1
    %807 = vsyncpa [#allocation6], 1
    %808 = vsyncpa [#allocation4], 1
    %s809 = scalar_lea.sflag [#allocation4], 1
    %810 = vsyncpa %s809, 1
    %811 = vsyncpa [#allocation10], 1
    %s812 = scalar_lea.sflag [#allocation10], 1
    %813 = vsyncpa %s812, 1

</llo_original>
